<compile_context>
chip_gen: v7x
topology: tpu7x:2x2x1
jax: 0.10.0
libtpu: 0.0.40
codegen_flags: <defaults>
</compile_context>

<pallas_src>
import math

import jax
import jax.numpy as jnp
from jax.experimental import pallas as pl


def _mean_kernel(x_ref, o_ref):
    # x_ref: (B, N, L)   o_ref: (B, L)
    x = x_ref[...].astype(jnp.float32)
    inv_n = 1.0 / x.shape[1]                      # compile-time constant
    o_ref[...] = (jnp.sum(x, axis=1) * inv_n).astype(o_ref.dtype)


def mean_layer_forward(x):
    """Pallas implementation of MeanLayer.forward: (B, ..., L) -> (B, L)."""
    B = x.shape[0]
    L = x.shape[-1]
    N = math.prod(x.shape[1:-1]) if x.ndim > 2 else 1
    x3 = x.reshape(B, N, L)

    out = pl.pallas_call(
        _mean_kernel,
        out_shape=jax.ShapeDtypeStruct((B, L), x.dtype),
        # No grid, no BlockSpecs: full arrays are staged into VMEM as single
        # blocks (well within the scoped VMEM limit at these shapes).
    )(x3)

    # Final x.view(x.shape[0], -1) — already (B, L), keep the reshape for
    # exact semantic parity with the module.
    return out.reshape(B, -1)


if __name__ == "__main__":
    # Small shapes consistent with the module: batch=2, channels=4, 16x16.
    key = jax.random.PRNGKey(0)
    x = jax.random.normal(key, (2, 4, 16, 16), jnp.float32)

    out = jax.block_until_ready(mean_layer_forward(x))

    # Shape / correctness checks against a pure-JAX reference.
    assert out.shape == (2, 16), out.shape
    ref = x.reshape(x.shape[0], -1, x.shape[-1]).mean(axis=1).reshape(x.shape[0], -1)
    assert bool(jnp.all(jnp.isfinite(out)))
    assert bool(jnp.allclose(out, ref, atol=1e-5, rtol=1e-5))
    print("KERNEL_OK")
</pallas_src>

<mosaic_0001>
module attributes {stable_mosaic.version = 11 : i64} {
  func.func @_mean_kernel(%arg0: memref<2x64x16xf32, #tpu.memory_space<vmem>>, %arg1: memref<2x16xf32, #tpu.memory_space<vmem>>) attributes {dimension_semantics = [], scalar_prefetch = 0 : i64, scratch_operands = 0 : i64, tpu.core_type = #tpu.core_type<tc>} {
    %c0 = arith.constant 0 : index
    %c0_0 = arith.constant 0 : index
    %c0_1 = arith.constant 0 : index
    %0 = vector.load %arg0[%c0, %c0_0, %c0_1] : memref<2x64x16xf32, #tpu.memory_space<vmem>>, vector<2x64x16xf32>
    %cst = arith.constant dense<0.000000e+00> : vector<2x16xf32>
    %1 = vector.multi_reduction <add>, %0, %cst [1] : vector<2x64x16xf32> to vector<2x16xf32>
    %cst_2 = arith.constant 1.562500e-02 : f32
    %2 = vector.broadcast %cst_2 : f32 to vector<2x16xf32>
    %3 = arith.mulf %1, %2 : vector<2x16xf32>
    %c0_3 = arith.constant 0 : index
    %c0_4 = arith.constant 0 : index
    %4 = vector.load %arg1[%c0_3, %c0_4] : memref<2x16xf32, #tpu.memory_space<vmem>>, vector<2x16xf32>
    tpu.vector_store %arg1[%c0_3, %c0_4], %3 {strides = array<i32>} : memref<2x16xf32, #tpu.memory_space<vmem>>, vector<2x16xf32>,
    return
  }
}

</mosaic_0001>

<llo_original>
// kernel: tpu_custom_call.1
$region0: #{tpu_custom_call.1}
  #allocation0 [shape = 'u32[]', space=smem, size = 0x4, offset = 0x4, fixed_abs, tag = 'smem constant byte address 0x4 - core index']
  #allocation1 [shape = 'u32[144,128]{1,0:T(1,128)}', space=vmem, size = 0x12000, scoped, tag = 'internal scratch']
  %s0 = inlined_call_operand.vmem [shape: f32[2,64,16], index: 0, kind: input, shape index: {}]
  %s1 = inlined_call_operand.hbm [shape: f32[2,16], index: 1, kind: output, shape index: {}]
  %s2 = sld [smem:[#allocation0]]
  $region14: #{tpu_custom_call.1} parent=0
    _
  %s4 = ssub.s32 1, %s2
  %s5 = scalar_select 0, %s4, %s2
  $region1: #{tpu_custom_call.1} parent=0
    #allocation2 [shape = 'u8[1024]{0}', space=vmem, size = 0x400, scoped, tag = 'output window, operand 0, single buffered']
    #allocation3 [shape = 's32[1]{0}', space=sflag, size = 0x4, scoped, tag = 'scoped memory for tpu_custom_call.1']
    %6 = vsyncpa [#allocation3], 0
    // Predicated region
    $region2: #{tpu_custom_call.1} parent=1 // pred_check
      _
    $region3: #{tpu_custom_call.1} parent=1 // pred_check_branch
      %8 = sbr.rel (0) target = $region5
    $region4: #{tpu_custom_call.1} parent=1 // pred_region
      _
    $region5: #{tpu_custom_call.1} parent=1 // pred_fallthru
      _
    %v9 = vld [vmem:[%s0] sm:$0xff]
    %v10 = vld [vmem:[%s0 + $0x8] sm:$0xff]
    %v11 = vld [vmem:[%s0 + $0x10] sm:$0xff]
    %v12 = vld [vmem:[%s0 + $0x18] sm:$0xff]
    %v13 = vld [vmem:[%s0 + $0x20] sm:$0xff]
    %v14 = vld [vmem:[%s0 + $0x28] sm:$0xff]
    %v15 = vld [vmem:[%s0 + $0x30] sm:$0xff]
    %v16 = vld [vmem:[%s0 + $0x38] sm:$0xff]
    %v17 = vld [vmem:[%s0 + $0x40] sm:$0xff]
    %v18 = vld [vmem:[%s0 + $0x48] sm:$0xff]
    %v19 = vld [vmem:[%s0 + $0x50] sm:$0xff]
    %v20 = vld [vmem:[%s0 + $0x58] sm:$0xff]
    %v21 = vld [vmem:[%s0 + $0x60] sm:$0xff]
    %v22 = vld [vmem:[%s0 + $0x68] sm:$0xff]
    %v23 = vld [vmem:[%s0 + $0x70] sm:$0xff]
    %v24 = vld [vmem:[%s0 + $0x78] sm:$0xff]
    %vm25 = vcmask 130048
    %v26 = vsel %vm25, %v9, 0.0
    %v27 = vsel %vm25, %v10, 0.0
    %v28 = vadd.f32 %v26, %v27
    %v29 = vsel %vm25, %v11, 0.0
    %v30 = vadd.f32 %v28, %v29
    %v31 = vsel %vm25, %v12, 0.0
    %v32 = vadd.f32 %v30, %v31
    %v33 = vsel %vm25, %v13, 0.0
    %v34 = vadd.f32 %v32, %v33
    %v35 = vsel %vm25, %v14, 0.0
    %v36 = vadd.f32 %v34, %v35
    %v37 = vsel %vm25, %v15, 0.0
    %v38 = vadd.f32 %v36, %v37
    %v39 = vsel %vm25, %v16, 0.0
    %v40 = vadd.f32 %v38, %v39
    %v41 = vrot.slane %v40, 4
    %v42 = vadd.f32 %v40, %v41
    %v43 = vrot.slane %v42, 2
    %v44 = vadd.f32 %v42, %v43
    %v45 = vrot.slane %v44, 1
    %v46 = vadd.f32 %v44, %v45
    %v47 = vsel %vm25, %v17, 0.0
    %v48 = vsel %vm25, %v18, 0.0
    %v49 = vadd.f32 %v47, %v48
    %v50 = vsel %vm25, %v19, 0.0
    %v51 = vadd.f32 %v49, %v50
    %v52 = vsel %vm25, %v20, 0.0
    %v53 = vadd.f32 %v51, %v52
    %v54 = vsel %vm25, %v21, 0.0
    %v55 = vadd.f32 %v53, %v54
    %v56 = vsel %vm25, %v22, 0.0
    %v57 = vadd.f32 %v55, %v56
    %v58 = vsel %vm25, %v23, 0.0
    %v59 = vadd.f32 %v57, %v58
    %v60 = vsel %vm25, %v24, 0.0
    %v61 = vadd.f32 %v59, %v60
    %v62 = vrot.slane %v61, 4
    %v63 = vadd.f32 %v61, %v62
    %v64 = vrot.slane %v63, 2
    %v65 = vadd.f32 %v63, %v64
    %v66 = vrot.slane %v65, 1
    %v67 = vadd.f32 %v65, %v66
    %v68 = vmul.f32 %v46, 0.015625
    %v69 = vmul.f32 %v67, 0.015625
    %vm72 = vcmask 1041409
    %v73 = vsel %vm72, %v69, %v68
    %vm75 = vcmask 123904
    %76 = vst.msk [vmem:[#allocation2] sm:$0x3] %vm75, %v73
    // Predicated region
    $region6: #{tpu_custom_call.1} parent=1 // pred_check
      _
    $region7: #{tpu_custom_call.1} parent=1 // pred_check_branch
      %78 = sbr.rel (0) target = $region9
    $region8: #{tpu_custom_call.1} parent=1 // pred_region
      %s80 = ssub.s32 32, 32
      %81 = vsyncadd [#allocation3], %s80
      %s83 = sshll.u32 [#allocation2], 4
      %s84 = int_to_ptr.vmem [resolvable:$true] %s83
      %86 = dma.vmem_to_hbm [thread:$0]  %s84, 32, %s1, [#allocation3]
    $region9: #{tpu_custom_call.1} parent=1 // pred_fallthru
      _
    // Predicated region
    $region10: #{tpu_custom_call.1} parent=1 // pred_check
      _
    $region11: #{tpu_custom_call.1} parent=1 // pred_check_branch
      %88 = sbr.rel (0) target = $region13
    $region12: #{tpu_custom_call.1} parent=1 // pred_region
      %89 = dma.done [#allocation3], 32
    $region13: #{tpu_custom_call.1} parent=1 // pred_fallthru
      _
    %90 = vsyncpa [#allocation3], 1

</llo_original>
